<compile_context>
chip_gen: v7x
topology: tpu7x:2x2x1
jax: 0.10.0
libtpu: 0.0.40
codegen_flags: <defaults>
</compile_context>

<pallas_src>
import functools

import jax
import jax.numpy as jnp
from jax import lax
from jax.experimental import pallas as pl
from jax.experimental.pallas import tpu as pltpu


def _round_up(x, m):
    return (x + m - 1) // m * m


# ---------------------------------------------------------------------------
# Phase 1: bulk input projection  xu[t,b,:] = x[t,b,:] @ U^T + bias
# Fully parallel over (T, batch) rows -> one big MXU matmul, hoisted out of
# the serial recurrence.
# ---------------------------------------------------------------------------
def _input_projection_kernel(x_ref, ut_ref, b_ref, xu_ref):
    xu_ref[...] = (
        jnp.dot(x_ref[...], ut_ref[...], preferred_element_type=jnp.float32)
        + b_ref[...])


# ---------------------------------------------------------------------------
# Phase 2: serial recurrence  h_t = h_{t-1} @ W^T + xu_t
#   grid = (batch_tiles, T_blocks); batch axis "parallel" (v7x megacore),
#   T axis "arbitrary" (sequential).  W^T is VMEM-resident; the hidden state
#   lives in an f32 VMEM scratch; h0 is DMA'd from HBM once per batch tile.
# ---------------------------------------------------------------------------
def _rnn_recurrence_kernel(xu_ref, wt_ref, h0_hbm, o_ref, h_scr, dma_sem,
                           *, ts, tb, compute_dtype):
    b = pl.program_id(0)
    i = pl.program_id(1)

    @pl.when(i == 0)
    def _():
        start = pl.multiple_of(b * tb, 8)
        cp = pltpu.make_async_copy(h0_hbm.at[pl.ds(start, tb), :], h_scr, dma_sem)
        cp.start()
        cp.wait()

    wt = wt_ref[...]  # resident W^T, loaded once per grid step

    def step(s, h):
        z = jnp.dot(h.astype(compute_dtype), wt,
                    preferred_element_type=jnp.float32)
        h_new = z + xu_ref[s]            # bias already folded into xu
        # nonlinearity=None (module default) -> identity
        # TODO(synk): apply the concrete subclass nonlinearity here if set.
        o_ref[s] = h_new.astype(o_ref.dtype)
        return h_new

    h_final = lax.fori_loop(0, ts, step, h_scr[...], unroll=True)
    h_scr[...] = h_final


def rnn_cell_forward_sequence(x_seq, U, W, bias, h0, *,
                              compute_dtype=jnp.float32,
                              out_dtype=jnp.float32,
                              ts=8,
                              batch_tile=None,
                              hidden_multiple=128):
    """
    x_seq : (T, batch, n_input)
    U     : (n_hidden, n_input)
    W     : (n_hidden, n_hidden)
    bias  : (n_hidden, 1)
    h0    : (batch, n_hidden)   hidden state kept batch-major (== torch self.h.T)
    returns (T, batch, n_hidden): per-step outputs of torch forward(x_t).

    hidden_multiple: 128 everywhere-correct; use 256 on v6e/v7x (2x256 MXU).
    batch_tile: set (e.g. 128) at production batch sizes to shard the
      recurrence across the 2 v7x TensorCores and bound live vregs.
    """
    T, batch, n_input = x_seq.shape
    n_hidden = U.shape[0]

    ip = _round_up(max(n_input, 1), 128)              # lane-dense input width
    hp = _round_up(max(n_hidden, 1), hidden_multiple)  # lane-dense hidden width
    bp = _round_up(max(batch, 1), 8)                   # sublane-aligned batch

    ts = max(1, min(int(ts), T))                       # timesteps per grid step
    tp = _round_up(T, ts)

    if batch_tile is None or batch_tile >= bp:
        tb = bp
    else:
        tb = _round_up(int(batch_tile), 8)
        bp = _round_up(bp, tb)

    f32 = jnp.float32
    csize = jnp.dtype(compute_dtype).itemsize
    osize = jnp.dtype(out_dtype).itemsize

    # --- one-time (per call, NOT per step) parameter packing ----------------
    # Zero padding guarantees padded lanes / rows contribute exactly zero.
    ut_pad = jnp.zeros((ip, hp), f32).at[:n_input, :n_hidden].set(
        U.T.astype(f32)).astype(compute_dtype)
    wt_pad = jnp.zeros((hp, hp), f32).at[:n_hidden, :n_hidden].set(
        W.T.astype(f32)).astype(compute_dtype)
    b_row = jnp.zeros((1, hp), f32).at[:, :n_hidden].set(
        bias.astype(f32).reshape(1, n_hidden))

    x_pad = jnp.zeros((tp, bp, ip), compute_dtype)
    x_pad = x_pad.at[:T, :batch, :n_input].set(x_seq.astype(compute_dtype))

    h0_pad = jnp.zeros((bp, hp), f32)
    h0_pad = h0_pad.at[:batch, :n_hidden].set(h0.astype(f32))

    # --- Phase 1: xu = x @ U^T + b over all (tp*bp) rows ---------------------
    M = tp * bp
    tm = 256 if M >= 256 else M
    mp = _round_up(M, tm)
    x2d = jnp.zeros((mp, ip), compute_dtype).at[:M].set(x_pad.reshape(M, ip))
    # TODO(synk): add a K-grid axis over `ip` for very large n_input.

    proj_vmem = (2 * (tm * ip * csize + tm * hp * 4)
                 + ip * hp * csize + hp * 4)
    xu2d = pl.pallas_call(
        _input_projection_kernel,
        out_shape=jax.ShapeDtypeStruct((mp, hp), f32),
        grid_spec=pltpu.PrefetchScalarGridSpec(
            num_scalar_prefetch=0,
            grid=(mp // tm,),
            in_specs=[
                pl.BlockSpec((tm, ip), lambda m: (m, 0)),   # x rows
                pl.BlockSpec((ip, hp), lambda m: (0, 0)),   # U^T (resident)
                pl.BlockSpec((1, hp), lambda m: (0, 0)),    # bias row (resident)
            ],
            out_specs=pl.BlockSpec((tm, hp), lambda m: (m, 0)),
        ),
        compiler_params=pltpu.CompilerParams(
            dimension_semantics=("parallel",),
            vmem_limit_bytes=min(128 << 20, max(32 << 20, 2 * proj_vmem))),
        cost_estimate=pl.CostEstimate(
            flops=2 * mp * ip * hp, transcendentals=0,
            bytes_accessed=mp * ip * csize + ip * hp * csize + mp * hp * 4),
    )(x2d, ut_pad, b_row)

    xu = xu2d[:M].reshape(tp, bp, hp)
    if bp > batch:
        # keep padded batch rows exactly zero through the recurrence
        xu = xu.at[:, batch:, :].set(0.0)

    # --- Phase 2: serial recurrence, ts timesteps per grid step --------------
    rec_kernel = functools.partial(
        _rnn_recurrence_kernel, ts=ts, tb=tb, compute_dtype=compute_dtype)

    rec_vmem = (hp * hp * csize              # resident W^T
                + 2 * ts * tb * hp * 4       # double-buffered xu blocks
                + 2 * ts * tb * hp * osize   # double-buffered out blocks
                + tb * hp * 4)               # hidden-state scratch

    out = pl.pallas_call(
        rec_kernel,
        out_shape=jax.ShapeDtypeStruct((tp, bp, hp), out_dtype),
        grid_spec=pltpu.PrefetchScalarGridSpec(
            num_scalar_prefetch=0,
            grid=(bp // tb, tp // ts),
            in_specs=[
                pl.BlockSpec((ts, tb, hp), lambda b, i: (i, b, 0)),  # xu block
                pl.BlockSpec((hp, hp), lambda b, i: (0, 0)),         # W^T resident
                pl.BlockSpec(memory_space=pl.ANY),                   # h0 in HBM
            ],
            out_specs=pl.BlockSpec((ts, tb, hp), lambda b, i: (i, b, 0)),
            scratch_shapes=[
                pltpu.VMEM((tb, hp), f32),        # carried hidden state (f32)
                pltpu.SemaphoreType.DMA(()),      # h0 init DMA
            ],
        ),
        compiler_params=pltpu.CompilerParams(
            dimension_semantics=("parallel", "arbitrary"),
            vmem_limit_bytes=min(128 << 20, max(32 << 20, 2 * rec_vmem))),
        cost_estimate=pl.CostEstimate(
            flops=2 * tp * bp * hp * hp, transcendentals=0,
            bytes_accessed=(tp * bp * hp * 4 + hp * hp * csize
                            + bp * hp * 4 + tp * bp * hp * osize)),
    )(xu, wt_pad, h0_pad)

    return out[:T, :batch, :n_hidden]


def rnn_cell_forward(x, U, W, bias, h_prev):
    """Single-step torch-equivalent forward.

    x      : (batch, n_input)
    h_prev : (batch, n_hidden)   (state kept batch-major permanently)
    returns (batch, n_hidden) == torch forward(x) output.
    """
    return rnn_cell_forward_sequence(x[None], U, W, bias, h_prev)[0]


if __name__ == "__main__":
    # Small shapes consistent with the module.
    T, n_input, n_hidden, batch = 6, 16, 32, 8

    key = jax.random.PRNGKey(0)
    kU, kW, kb, kx, kh = jax.random.split(key, 5)

    # Parameter init mirroring a concrete RNNCell (U ~ N(0, sqrt(1/n_input)),
    # W ~ N(0, sqrt(1/n_hidden)); bias nonzero to exercise that path).
    U = jax.random.normal(kU, (n_hidden, n_input), jnp.float32) * jnp.sqrt(1.0 / n_input)
    W = jax.random.normal(kW, (n_hidden, n_hidden), jnp.float32) * jnp.sqrt(1.0 / n_hidden)
    bias = jax.random.normal(kb, (n_hidden, 1), jnp.float32) * 0.1

    x_seq = jax.random.normal(kx, (T, batch, n_input), jnp.float32)
    h0 = jax.random.normal(kh, (batch, n_hidden), jnp.float32)  # batch-major state

    out_seq = jax.block_until_ready(rnn_cell_forward_sequence(x_seq, U, W, bias, h0))

    # Pure-JAX reference of the torch recurrence: h = U@x_t.T + W@h + b; emit h.T.
    h = h0.T  # (n_hidden, batch)
    refs = []
    for t in range(T):
        h = U @ x_seq[t].T + W @ h + bias
        refs.append(h.T)
    ref_seq = jnp.stack(refs)

    assert out_seq.shape == (T, batch, n_hidden)
    assert jnp.allclose(out_seq, ref_seq, atol=1e-4, rtol=1e-4), "sequence mismatch"

    # Single-step API check.
    out_step = jax.block_until_ready(rnn_cell_forward(x_seq[0], U, W, bias, h0))
    assert jnp.allclose(out_step, ref_seq[0], atol=1e-4, rtol=1e-4), "step mismatch"

    # bf16 compute path (f32 accumulation + f32-carried hidden state) smoke test.
    out_bf16 = jax.block_until_ready(
        rnn_cell_forward_sequence(x_seq, U, W, bias, h0,
                                  compute_dtype=jnp.bfloat16,
                                  out_dtype=jnp.bfloat16))
    assert out_bf16.shape == (T, batch, n_hidden)
    assert bool(jnp.all(jnp.isfinite(out_bf16.astype(jnp.float32))))

    print("KERNEL_OK")
</pallas_src>

<mosaic_0001>
module attributes {stable_mosaic.version = 11 : i64} {
  func.func @_input_projection_kernel(%arg0: i32, %arg1: memref<48x128xf32, #tpu.memory_space<vmem>>, %arg2: memref<128x128xf32, #tpu.memory_space<vmem>>, %arg3: memref<1x128xf32, #tpu.memory_space<vmem>>, %arg4: memref<48x128xf32, #tpu.memory_space<vmem>>) attributes {dimension_semantics = [#tpu.dimension_semantics<parallel>], iteration_bounds = array<i64: 1>, scalar_prefetch = 0 : i64, scratch_operands = 0 : i64, tpu.core_type = #tpu.core_type<tc>, window_params = [{transform_indices = @transform_0, window_bounds = array<i64: 48, 128>}, {pipeline_mode = #tpu.pipeline_mode<synchronous>, transform_indices = @transform_1, window_bounds = array<i64: 128, 128>}, {pipeline_mode = #tpu.pipeline_mode<synchronous>, transform_indices = @transform_2, window_bounds = array<i64: 1, 128>}, {transform_indices = @transform_3, window_bounds = array<i64: 48, 128>}]} {
    %c0 = arith.constant 0 : index
    %c0_0 = arith.constant 0 : index
    %0 = vector.load %arg1[%c0, %c0_0] : memref<48x128xf32, #tpu.memory_space<vmem>>, vector<48x128xf32>
    %c0_1 = arith.constant 0 : index
    %c0_2 = arith.constant 0 : index
    %1 = vector.load %arg2[%c0_1, %c0_2] : memref<128x128xf32, #tpu.memory_space<vmem>>, vector<128x128xf32>
    %cst = arith.constant dense<0.000000e+00> : vector<48x128xf32>
    %2 = tpu.matmul %0, %1, %cst {dimension_numbers = #tpu.dot_dimension_numbers<[1], [0], [0], [1], [0, 0, 1, 1], [], []>} : vector<48x128xf32>, vector<128x128xf32>, vector<48x128xf32> -> vector<48x128xf32>
    %c0_3 = arith.constant 0 : index
    %c0_4 = arith.constant 0 : index
    %3 = vector.load %arg3[%c0_3, %c0_4] : memref<1x128xf32, #tpu.memory_space<vmem>>, vector<1x128xf32>
    %4 = vector.broadcast %3 : vector<1x128xf32> to vector<48x128xf32>
    %5 = arith.addf %2, %4 : vector<48x128xf32>
    %c0_5 = arith.constant 0 : index
    %c0_6 = arith.constant 0 : index
    %6 = vector.load %arg4[%c0_5, %c0_6] : memref<48x128xf32, #tpu.memory_space<vmem>>, vector<48x128xf32>
    tpu.vector_store %arg4[%c0_5, %c0_6], %5 {strides = array<i32>} : memref<48x128xf32, #tpu.memory_space<vmem>>, vector<48x128xf32>,
    return
  }
  func.func @transform_0(%arg0: i32) -> (i32, i32) {
    %c0_i32 = arith.constant 0 : i32
    %c0_i32_0 = arith.constant 0 : i32
    return %arg0, %c0_i32 : i32, i32
  }
  func.func @transform_1(%arg0: i32) -> (i32, i32) {
    %c0_i32 = arith.constant 0 : i32
    %c0_i32_0 = arith.constant 0 : i32
    %c0_i32_1 = arith.constant 0 : i32
    return %c0_i32, %c0_i32_0 : i32, i32
  }
  func.func @transform_2(%arg0: i32) -> (i32, i32) {
    %c0_i32 = arith.constant 0 : i32
    %c0_i32_0 = arith.constant 0 : i32
    %c0_i32_1 = arith.constant 0 : i32
    return %c0_i32, %c0_i32_0 : i32, i32
  }
  func.func @transform_3(%arg0: i32) -> (i32, i32) {
    %c0_i32 = arith.constant 0 : i32
    %c0_i32_0 = arith.constant 0 : i32
    return %arg0, %c0_i32 : i32, i32
  }
}

</mosaic_0001>

<llo_original>
// kernel: tpu_custom_call.1
$region0: #{tpu_custom_call.1}
  #allocation0 [shape = 'u32[]', space=smem, size = 0x4, offset = 0x4, fixed_abs, tag = 'smem constant byte address 0x4 - core index']
  #allocation1 [shape = 'u32[144,128]{1,0:T(1,128)}', space=vmem, size = 0x12000, scoped, tag = 'internal scratch']
  %s0 = inlined_call_operand.hbm [shape: f32[48,128], index: 0, kind: input, shape index: {}]
  %s1 = inlined_call_operand.hbm [shape: f32[128,128], index: 1, kind: input, shape index: {}]
  %s2 = inlined_call_operand.vmem [shape: f32[1,128], index: 2, kind: input, shape index: {}]
  %s3 = inlined_call_operand.hbm [shape: f32[48,128], index: 3, kind: output, shape index: {}]
  %s4 = sld [smem:[#allocation0]]
  $region30: #{tpu_custom_call.1} parent=0
    _
  %s6 = ssub.s32 1, %s4
  %s7 = scalar_select 0, %s6, %s4
  $region1: #{tpu_custom_call.1} parent=0
    #allocation2 [shape = 'u8[24576]{0}', space=vmem, size = 0x6000, scoped, tag = 'input window, operand 0, single buffered']
    #allocation3 [shape = 's32[1]{0}', space=sflag, size = 0x4, scoped, tag = 'scoped memory for tpu_custom_call.1']
    #allocation4 [shape = 's32[1]{0}', space=sflag, size = 0x4, scoped, tag = 'scoped memory for tpu_custom_call.1']
    #allocation5 [shape = 'u8[65536]{0}', space=vmem, size = 0x10000, scoped, tag = 'input window, operand 1, single buffered']
    #allocation6 [shape = 's32[1]{0}', space=sflag, size = 0x4, scoped, tag = 'scoped memory for tpu_custom_call.1']
    #allocation7 [shape = 'u8[24576]{0}', space=vmem, size = 0x6000, scoped, tag = 'output window, operand 0, single buffered']
    %8 = vsyncpa [#allocation3], 0
    %9 = vsyncpa [#allocation6], 0
    %10 = vsyncpa [#allocation4], 0
    // Predicated region
    $region2: #{tpu_custom_call.1} parent=1 // pred_check
      _
    $region3: #{tpu_custom_call.1} parent=1 // pred_check_branch
      %12 = sbr.rel (0) target = $region5
    $region4: #{tpu_custom_call.1} parent=1 // pred_region
      %s14 = ssub.s32 768, 768
      %15 = vsyncadd [#allocation3], %s14
      %s16 = sshll.u32 [#allocation2], 4
      %s17 = int_to_ptr.vmem [resolvable:$true] %s16
      %22 = dma.hbm_to_vmem [thread:$0]  %s0, 768, %s17, [#allocation3], 128, 128, 8
    $region5: #{tpu_custom_call.1} parent=1 // pred_fallthru
      _
    // Predicated region
    $region6: #{tpu_custom_call.1} parent=1 // pred_check
      _
    $region7: #{tpu_custom_call.1} parent=1 // pred_check_branch
      %24 = sbr.rel (0) target = $region9
    $region8: #{tpu_custom_call.1} parent=1 // pred_region
      %s26 = ssub.s32 2048, 2048
      %27 = vsyncadd [#allocation6], %s26
      %s28 = sshll.u32 [#allocation5], 4
      %s29 = int_to_ptr.vmem [resolvable:$true] %s28
      %34 = dma.hbm_to_vmem [thread:$0]  %s1, 2048, %s29, [#allocation6], 128, 128, 8
    $region9: #{tpu_custom_call.1} parent=1 // pred_fallthru
      _
    // Predicated region
    $region10: #{tpu_custom_call.1} parent=1 // pred_check
      _
    $region11: #{tpu_custom_call.1} parent=1 // pred_check_branch
      %36 = sbr.rel (0) target = $region13
    $region12: #{tpu_custom_call.1} parent=1 // pred_region
      _
    $region13: #{tpu_custom_call.1} parent=1 // pred_fallthru
      _
    // Predicated region
    $region14: #{tpu_custom_call.1} parent=1 // pred_check
      _
    $region15: #{tpu_custom_call.1} parent=1 // pred_check_branch
      %38 = sbr.rel (0) target = $region17
    $region16: #{tpu_custom_call.1} parent=1 // pred_region
      %39 = dma.done [#allocation3], 768
    $region17: #{tpu_custom_call.1} parent=1 // pred_fallthru
      _
    // Predicated region
    $region18: #{tpu_custom_call.1} parent=1 // pred_check
      _
    $region19: #{tpu_custom_call.1} parent=1 // pred_check_branch
      %41 = sbr.rel (0) target = $region21
    $region20: #{tpu_custom_call.1} parent=1 // pred_region
      %42 = dma.done [#allocation6], 2048
    $region21: #{tpu_custom_call.1} parent=1 // pred_fallthru
      _
    %v43 = vld [vmem:[#allocation2] sm:$0xff]
    %v44 = vld [vmem:[#allocation2 + $0x8] sm:$0xff]
    %v45 = vld [vmem:[#allocation2 + $0x10] sm:$0xff]
    %v46 = vld [vmem:[#allocation2 + $0x18] sm:$0xff]
    %v47 = vld [vmem:[#allocation2 + $0x20] sm:$0xff]
    %v48 = vld [vmem:[#allocation2 + $0x28] sm:$0xff]
    %v49 = vld [vmem:[#allocation5] sm:$0xff]
    %v50 = vld [vmem:[#allocation5 + $0x8] sm:$0xff]
    %v51 = vld [vmem:[#allocation5 + $0x10] sm:$0xff]
    %v52 = vld [vmem:[#allocation5 + $0x18] sm:$0xff]
    %v53 = vld [vmem:[#allocation5 + $0x20] sm:$0xff]
    %v54 = vld [vmem:[#allocation5 + $0x28] sm:$0xff]
    %v55 = vld [vmem:[#allocation5 + $0x30] sm:$0xff]
    %v56 = vld [vmem:[#allocation5 + $0x38] sm:$0xff]
    %v57 = vld [vmem:[#allocation5 + $0x40] sm:$0xff]
    %v58 = vld [vmem:[#allocation5 + $0x48] sm:$0xff]
    %v59 = vld [vmem:[#allocation5 + $0x50] sm:$0xff]
    %v60 = vld [vmem:[#allocation5 + $0x58] sm:$0xff]
    %v61 = vld [vmem:[#allocation5 + $0x60] sm:$0xff]
    %v62 = vld [vmem:[#allocation5 + $0x68] sm:$0xff]
    %v63 = vld [vmem:[#allocation5 + $0x70] sm:$0xff]
    %v64 = vld [vmem:[#allocation5 + $0x78] sm:$0xff]
    %v65 = vld [vmem:[%s2] sm:$0x1]
    %v67 = vlaneseq
    %v68 = vshrl.u32 %v67, 7
    %v69 = vsub.s32 0, %v68
    %v70 = vrot.slane %v65, %v69
    %72 = vmatprep.subr.mxu0 0.0
    %73 = vmatpush1.msra.mxu0 %v49
    %74 = vmatprep.subr.mxu0 0.0
    %75 = vmatpush1.msra.mxu0 %v50
    %76 = vmatprep.subr.mxu0 0.0
    %77 = vmatpush1.msra.mxu0 %v51
    %78 = vmatprep.subr.mxu0 0.0
    %79 = vmatpush1.msra.mxu0 %v52
    %80 = vmatprep.subr.mxu0 0.0
    %81 = vmatpush1.msra.mxu0 %v53
    %82 = vmatprep.subr.mxu0 0.0
    %83 = vmatpush1.msra.mxu0 %v54
    %84 = vmatprep.subr.mxu0 0.0
    %85 = vmatpush1.msra.mxu0 %v55
    %86 = vmatprep.subr.mxu0 0.0
    %87 = vmatpush1.msra.mxu0 %v56
    %88 = vmatprep.subr.mxu0 0.0
    %89 = vmatpush1.msra.mxu0 %v57
    %90 = vmatprep.subr.mxu0 0.0
    %91 = vmatpush1.msra.mxu0 %v58
    %92 = vmatprep.subr.mxu0 0.0
    %93 = vmatpush1.msra.mxu0 %v59
    %94 = vmatprep.subr.mxu0 0.0
    %95 = vmatpush1.msra.mxu0 %v60
    %96 = vmatprep.subr.mxu0 0.0
    %97 = vmatpush1.msra.mxu0 %v61
    %98 = vmatprep.subr.mxu0 0.0
    %99 = vmatpush1.msra.mxu0 %v62
    %100 = vmatprep.subr.mxu0 0.0
    %101 = vmatpush1.msra.mxu0 %v63
    %102 = vmatprep.subr.mxu0 0.0
    %103 = vmatpush1.msra.mxu0 %v64
    %104 = vmatprep.subr.mxu0 0.0
    %105 = vmatpush1.msra.mxu0 0.0
    %106 = vmatprep.subr.mxu0 0.0
    %107 = vmatpush1.msra.mxu0 0.0
    %108 = vmatprep.subr.mxu0 0.0
    %109 = vmatpush1.msra.mxu0 0.0
    %110 = vmatprep.subr.mxu0 0.0
    %111 = vmatpush1.msra.mxu0 0.0
    %112 = vmatprep.subr.mxu0 0.0
    %113 = vmatpush1.msra.mxu0 0.0
    %114 = vmatprep.subr.mxu0 0.0
    %115 = vmatpush1.msra.mxu0 0.0
    %116 = vmatprep.subr.mxu0 0.0
    %117 = vmatpush1.msra.mxu0 0.0
    %118 = vmatprep.subr.mxu0 0.0
    %119 = vmatpush1.msra.mxu0 0.0
    %120 = vmatprep.subr.mxu0 0.0
    %121 = vmatpush1.msra.mxu0 0.0
    %122 = vmatprep.subr.mxu0 0.0
    %123 = vmatpush1.msra.mxu0 0.0
    %124 = vmatprep.subr.mxu0 0.0
    %125 = vmatpush1.msra.mxu0 0.0
    %126 = vmatprep.subr.mxu0 0.0
    %127 = vmatpush1.msra.mxu0 0.0
    %128 = vmatprep.subr.mxu0 0.0
    %129 = vmatpush1.msra.mxu0 0.0
    %130 = vmatprep.subr.mxu0 0.0
    %131 = vmatpush1.msra.mxu0 0.0
    %132 = vmatprep.subr.mxu0 0.0
    %133 = vmatpush1.msra.mxu0 0.0
    %134 = vmatprep.subr.mxu0 0.0
    %135 = vmatpush1.msra.mxu0 0.0
    %136 = vmatprep.mubr.f32.mxu0 0.0
    %137 = vmatmul.mubr.f32.gmra.mrb[0].mxu0 %v43
    %v138 = vpop.f32.mrb[0].mxu0
    %v139 = vadd.f32 %v70, %v138
    %v140 = vpop.f32.mrb[0].mxu0
    %141 = vmatprep.mubr.f32.mxu0 0.0
    %142 = vmatmul.mubr.f32.gmra.mrb[0].mxu0 %v44
    %v143 = vpop.f32.mrb[0].mxu0
    %v144 = vadd.f32 %v70, %v143
    %v145 = vpop.f32.mrb[0].mxu0
    %146 = vmatprep.mubr.f32.mxu0 0.0
    %147 = vmatmul.mubr.f32.gmra.mrb[0].mxu0 %v45
    %v148 = vpop.f32.mrb[0].mxu0
    %v149 = vadd.f32 %v70, %v148
    %v150 = vpop.f32.mrb[0].mxu0
    %151 = vmatprep.mubr.f32.mxu0 0.0
    %152 = vmatmul.mubr.f32.gmra.mrb[0].mxu0 %v46
    %v153 = vpop.f32.mrb[0].mxu0
    %v154 = vadd.f32 %v70, %v153
    %v155 = vpop.f32.mrb[0].mxu0
    %156 = vmatprep.mubr.f32.mxu0 0.0
    %157 = vmatmul.mubr.f32.gmra.mrb[0].mxu0 %v47
    %v158 = vpop.f32.mrb[0].mxu0
    %v159 = vadd.f32 %v70, %v158
    %v160 = vpop.f32.mrb[0].mxu0
    %161 = vmatprep.mubr.f32.mxu0 0.0
    %162 = vmatmul.mubr.f32.gmra.mrb[0].mxu0 %v48
    %v163 = vpop.f32.mrb[0].mxu0
    %v164 = vadd.f32 %v70, %v163
    %v165 = vpop.f32.mrb[0].mxu0
    %166 = vdwg.mxu0
    %167 = vst [vmem:[#allocation7] sm:$0xff] %v139
    %168 = vst [vmem:[#allocation7 + $0x8] sm:$0xff] %v144
    %169 = vst [vmem:[#allocation7 + $0x10] sm:$0xff] %v149
    %170 = vst [vmem:[#allocation7 + $0x18] sm:$0xff] %v154
    %171 = vst [vmem:[#allocation7 + $0x20] sm:$0xff] %v159
    %172 = vst [vmem:[#allocation7 + $0x28] sm:$0xff] %v164
    // Predicated region
    $region22: #{tpu_custom_call.1} parent=1 // pred_check
      _
    $region23: #{tpu_custom_call.1} parent=1 // pred_check_branch
      %174 = sbr.rel (0) target = $region25
    $region24: #{tpu_custom_call.1} parent=1 // pred_region
      %s176 = ssub.s32 768, 768
      %177 = vsyncadd [#allocation4], %s176
      %s178 = sshll.u32 [#allocation7], 4
      %s179 = int_to_ptr.vmem [resolvable:$true] %s178
      %184 = dma.vmem_to_hbm [thread:$0]  %s179, 768, %s3, [#allocation4], 128, 128, 8
    $region25: #{tpu_custom_call.1} parent=1 // pred_fallthru
      _
    // Predicated region
    $region26: #{tpu_custom_call.1} parent=1 // pred_check
      _
    $region27: #{tpu_custom_call.1} parent=1 // pred_check_branch
      %186 = sbr.rel (0) target = $region29
    $region28: #{tpu_custom_call.1} parent=1 // pred_region
      %187 = dma.done [#allocation4], 768
    $region29: #{tpu_custom_call.1} parent=1 // pred_fallthru
      _
    %188 = vsyncpa [#allocation3], 1
    %189 = vsyncpa [#allocation6], 1
    %190 = vsyncpa [#allocation4], 1

</llo_original>
